<compile_context>
chip_gen: v6e
topology: v6e:2x2x1
jax: 0.10.0
libtpu: 0.0.40
codegen_flags: <defaults>
</compile_context>

<pallas_src>
import jax
import jax.numpy as jnp
from jax.experimental import pallas as pl
from jax.experimental.pallas import tpu as pltpu


def _network_prediction_kernel(ctx_ref, wt_ref, out_ref):
    """One batch tile of  y = ctx @ W^T, replicated predict_terms times, lane-dense.

    ctx_ref: (TILE_B, C)      context rows for this tile
    wt_ref:  (C, E)           pre-transposed weight (constant block -> VMEM-resident)
    out_ref: (TILE_B, P * E)  flattened output tile (full-lane, unmasked stores)
    """
    y = jnp.dot(ctx_ref[...], wt_ref[...],
                preferred_element_type=jnp.float32)          # (TILE_B, E)
    reps = out_ref.shape[1] // y.shape[1]                    # == predict_terms (static)
    out_ref[...] = jnp.tile(y, (1, reps)).astype(out_ref.dtype)


def _device_tiling_budget():
    """Returns (tile_vmem_budget_bytes, vmem_limit_bytes, prefer_multi_step)."""
    try:
        kind = jax.devices()[0].device_kind.lower()
    except Exception:
        kind = ""
    if "v5" in kind or "v6" in kind:
        # 128 MiB physical VMEM, single TensorCore: big tiles, raise scoped limit.
        return 80 << 20, 100 << 20, False
    # v7x (64 MiB physical VMEM, 2 TensorCores) or unknown: conservative budget,
    # prefer >=2 grid steps so "parallel" can shard across both cores.
    return 20 << 20, 48 << 20, True


def _pick_tile_b(batch, ctx_cols, out_cols, weight_bytes, vmem_budget,
                 prefer_multi_step):
    """Largest multiple-of-8 divisor of `batch` whose double-buffered tiles fit VMEM."""
    if batch % 8 != 0:
        # Whole-batch fallback: block == full array dims satisfies the (8,128) rule.
        return batch
    budget = max(vmem_budget - 2 * weight_bytes, 2 * 4 * 8 * (ctx_cols + out_cols))
    bytes_per_row = 2 * 4 * (ctx_cols + out_cols)   # double-buffered ctx + out, f32
    max_rows = max(8, (budget // bytes_per_row) // 8 * 8)
    cap = min(batch, max_rows)
    if prefer_multi_step and batch >= 16 and (batch // 2) % 8 == 0:
        cap = min(cap, batch // 2)                  # guarantee >=2 grid steps
    t = cap - (cap % 8)
    while t >= 8 and batch % t != 0:
        t -= 8
    return t if t >= 8 else batch


def network_prediction_forward(context, weight, predict_terms, tile_b=None):
    """Forward pass of `network_prediction`.

    context: (B, context_size) float32
    weight:  (encoding_size, context_size) float32  (PyTorch nn.Linear layout)
    Returns  (B, predict_terms, encoding_size), matching
             torch.stack([fcnet(context)] * predict_terms, dim=1).
    """
    B, C = context.shape
    E, Cw = weight.shape
    assert C == Cw, "context_size mismatch between context and weight"
    P = int(predict_terms)
    PE = P * E

    # One-time (E, C) -> (C, E) transpose in the wrapper so the in-kernel dot needs
    # no per-grid-step RHS re-layout work on the XLU.
    w_t = jnp.transpose(weight)

    tile_budget, vmem_limit, prefer_multi = _device_tiling_budget()
    if tile_b is None:
        tile_b = _pick_tile_b(B, C, PE, 4 * E * C, tile_budget, prefer_multi)
    assert B % tile_b == 0, "batch tile must evenly divide the batch"
    assert tile_b % 8 == 0 or tile_b == B, \
        "tile_b must be a multiple of 8 (or equal to the full batch)"

    cost = pl.CostEstimate(
        flops=2 * B * C * E,
        transcendentals=0,
        bytes_accessed=4 * (B * C + C * E + B * PE),
    )

    out_flat = pl.pallas_call(
        _network_prediction_kernel,
        out_shape=jax.ShapeDtypeStruct((B, PE), context.dtype),
        grid=(B // tile_b,),
        in_specs=[
            # Batch-tiled context: (TILE_B, C); C equals the full array dim.
            pl.BlockSpec((tile_b, C), lambda i: (i, 0)),
            # Full pre-transposed weight; constant index_map -> VMEM-resident.
            pl.BlockSpec((C, E), lambda i: (0, 0)),
        ],
        # Flattened lane-dense output (P*E lanes) written directly by the kernel.
        out_specs=pl.BlockSpec((tile_b, PE), lambda i: (i, 0)),
        compiler_params=pltpu.CompilerParams(
            dimension_semantics=("parallel",),   # batch tiles are independent
            vmem_limit_bytes=int(vmem_limit),
        ),
        cost_estimate=cost,
    )(context, w_t)

    # Contiguous reshape (free): (B, P*E) -> (B, P, E) matches torch.stack(dim=1).
    return out_flat.reshape(B, P, E)


if __name__ == "__main__":
    # Small shapes consistent with the module: Linear(context_size, encoding_size),
    # applied predict_terms times.
    CONTEXT_SIZE = 32
    ENCODING_SIZE = 32
    PREDICT_TERMS = 8
    BATCH = 16  # with tile_b=8 the grid has 2 steps -> exercises the pipeline

    key = jax.random.PRNGKey(0)
    kc, kw = jax.random.split(key)

    context = jax.random.normal(kc, (BATCH, CONTEXT_SIZE), dtype=jnp.float32)

    # PyTorch nn.Linear default init: uniform(-1/sqrt(fan_in), 1/sqrt(fan_in)).
    bound = 1.0 / (CONTEXT_SIZE ** 0.5)
    weight = jax.random.uniform(
        kw, (ENCODING_SIZE, CONTEXT_SIZE), dtype=jnp.float32,
        minval=-bound, maxval=bound)

    out = network_prediction_forward(context, weight, PREDICT_TERMS, tile_b=8)
    jax.block_until_ready(out)

    # Pure-JAX reference of the same math.
    ref_once = context @ weight.T                               # (B, E)
    ref = jnp.broadcast_to(ref_once[:, None, :],
                           (BATCH, PREDICT_TERMS, ENCODING_SIZE))
    assert out.shape == (BATCH, PREDICT_TERMS, ENCODING_SIZE)
    assert jnp.allclose(out, ref, atol=1e-5, rtol=1e-5)

    # Also exercise the automatic (budget-driven) tile picker.
    out_auto = network_prediction_forward(context, weight, PREDICT_TERMS)
    jax.block_until_ready(out_auto)
    assert jnp.allclose(out_auto, ref, atol=1e-5, rtol=1e-5)

    print("KERNEL_OK")
</pallas_src>

<mosaic_0001>
module attributes {stable_mosaic.version = 11 : i64} {
  func.func @_network_prediction_kernel(%arg0: i32, %arg1: memref<8x32xf32, #tpu.memory_space<vmem>>, %arg2: memref<32x32xf32, #tpu.memory_space<vmem>>, %arg3: memref<8x256xf32, #tpu.memory_space<vmem>>) attributes {dimension_semantics = [#tpu.dimension_semantics<parallel>], iteration_bounds = array<i64: 2>, scalar_prefetch = 0 : i64, scratch_operands = 0 : i64, tpu.core_type = #tpu.core_type<tc>, window_params = [{transform_indices = @transform_0, window_bounds = array<i64: 8, 32>}, {pipeline_mode = #tpu.pipeline_mode<synchronous>, transform_indices = @transform_1, window_bounds = array<i64: 32, 32>}, {transform_indices = @transform_2, window_bounds = array<i64: 8, 256>}]} {
    %c0 = arith.constant 0 : index
    %c0_0 = arith.constant 0 : index
    %0 = vector.load %arg1[%c0, %c0_0] : memref<8x32xf32, #tpu.memory_space<vmem>>, vector<8x32xf32>
    %c0_1 = arith.constant 0 : index
    %c0_2 = arith.constant 0 : index
    %1 = vector.load %arg2[%c0_1, %c0_2] : memref<32x32xf32, #tpu.memory_space<vmem>>, vector<32x32xf32>
    %cst = arith.constant dense<0.000000e+00> : vector<8x32xf32>
    %2 = tpu.matmul %0, %1, %cst {dimension_numbers = #tpu.dot_dimension_numbers<[1], [0], [0], [1], [0, 0, 1, 1], [], []>} : vector<8x32xf32>, vector<32x32xf32>, vector<8x32xf32> -> vector<8x32xf32>
    %3 = tpu.concatenate %2, %2, %2, %2, %2, %2, %2, %2 in 1 : vector<8x32xf32>, vector<8x32xf32>, vector<8x32xf32>, vector<8x32xf32>, vector<8x32xf32>, vector<8x32xf32>, vector<8x32xf32>, vector<8x32xf32> -> vector<8x256xf32>
    %c0_3 = arith.constant 0 : index
    %c0_4 = arith.constant 0 : index
    %4 = vector.load %arg3[%c0_3, %c0_4] : memref<8x256xf32, #tpu.memory_space<vmem>>, vector<8x256xf32>
    tpu.vector_store %arg3[%c0_3, %c0_4], %3 {strides = array<i32>} : memref<8x256xf32, #tpu.memory_space<vmem>>, vector<8x256xf32>,
    return
  }
  func.func @transform_0(%arg0: i32) -> (i32, i32) {
    %c0_i32 = arith.constant 0 : i32
    %c0_i32_0 = arith.constant 0 : i32
    return %arg0, %c0_i32 : i32, i32
  }
  func.func @transform_1(%arg0: i32) -> (i32, i32) {
    %c0_i32 = arith.constant 0 : i32
    %c0_i32_0 = arith.constant 0 : i32
    %c0_i32_1 = arith.constant 0 : i32
    return %c0_i32, %c0_i32_0 : i32, i32
  }
  func.func @transform_2(%arg0: i32) -> (i32, i32) {
    %c0_i32 = arith.constant 0 : i32
    %c0_i32_0 = arith.constant 0 : i32
    return %arg0, %c0_i32 : i32, i32
  }
}

</mosaic_0001>

<llo_original>
// kernel: tpu_custom_call.1
$region0: #{tpu_custom_call.1}
  #allocation0 [shape = 'u32[]', space=smem, size = 0x4, offset = 0x4, fixed_abs, tag = 'smem constant byte address 0x4 - core index']
  #allocation1 [shape = 'u32[144,128]{1,0:T(1,128)}', space=vmem, size = 0x12000, scoped, tag = 'internal scratch']
  %s0 = inlined_call_operand.hbm [shape: f32[16,32], index: 0, kind: input, shape index: {}]
  %s1 = inlined_call_operand.hbm [shape: f32[32,32], index: 1, kind: input, shape index: {}]
  %s2 = inlined_call_operand.hbm [shape: f32[16,256], index: 2, kind: output, shape index: {}]
  %s3 = sld [smem:[#allocation0]]
  $region49: #{tpu_custom_call.1} parent=0
    _
  %s5 = ssub.s32 1, %s3
  %s6 = scalar_select 0, %s5, %s3
  $region1: #{tpu_custom_call.1} parent=0
    #allocation2 [shape = 'u8[8192]{0}', space=vmem, size = 0x2000, scoped, tag = 'input window, operand 0']
    #allocation3 [shape = 's32[2]{0}', space=sflag, size = 0x8, scoped, tag = 'scoped memory for tpu_custom_call.1']
    #allocation4 [shape = 's32[2]{0}', space=sflag, size = 0x8, scoped, tag = 'scoped memory for tpu_custom_call.1']
    #allocation5 [shape = 'u8[16384]{0}', space=vmem, size = 0x4000, scoped, tag = 'input window, operand 1, single buffered']
    #allocation6 [shape = 's32[1]{0}', space=sflag, size = 0x4, scoped, tag = 'scoped memory for tpu_custom_call.1']
    #allocation7 [shape = 'u8[16384]{0}', space=vmem, size = 0x4000, scoped, tag = 'output window, operand 0']
    %7 = vsyncpa [#allocation3], 0
    %s8 = scalar_lea.sflag [#allocation3], 1
    %9 = vsyncpa %s8, 0
    %10 = vsyncpa [#allocation6], 0
    %11 = vsyncpa [#allocation4], 0
    %s12 = scalar_lea.sflag [#allocation4], 1
    %13 = vsyncpa %s12, 0
    loop: start=0, step=1, limit=4
    $region2: #{tpu_custom_call.1} parent=1 // loop_pre_header
      _
    $region3: #{tpu_custom_call.1} parent=1 // loop_header
      %s15 = sphi 0, %s19
      %p16 = scmp.ge.s32.totalorder %s15, 4
      %s25 = sphi 0, %s27
      %s28 = sphi 0, %s25
      %s29 = sphi 0, %s28
      %s45 = sphi 0, %s29
      %s49 = sphi 0, %s49
      %s51 = sphi 0, %s49
      %s52 = sphi 0, %s51
      %s66 = sphi 0, %s52
      %s72 = sphi 0, %s74
      %s75 = sphi 0, %s72
      %s76 = sphi 0, %s75
      %s92 = sphi 0, %s76
    $region4: #{tpu_custom_call.1} parent=1 // loop_header_branch
      %18 = sbr.rel (%p16) target = $region8
    $region5: #{tpu_custom_call.1} parent=1 // loop_body
      %s20 = ssub.s32 %s15, 1
      %s21 = ssub.s32 %s15, 2
      %s22 = sadd.s32 %s15, 1
      %s23 = ssub.s32 %s15, %s22
      %p24 = scmp.eq.s32.totalorder %s23, 0
      %s26 = sadd.s32 %s25, 1
      %s27 = scalar_select %p24, %s25, %s26
      %p30 = pneg %p24
      %p31 = scmp.eq.s32.totalorder %s15, 1
      %p32 = por %p30, %p31
      %p33 = scmp.ne.s32.totalorder %s25, %s28
      %p34 = scmp.eq.s32.totalorder %s15, 0
      %p35 = por %p33, %p34
      %p36 = scmp.ne.s32.totalorder %s25, %s28
      %p37 = scmp.eq.s32.totalorder %s20, 1
      %p38 = por %p36, %p37
      %p39 = scmp.ne.s32.totalorder %s28, %s29
      %p40 = scmp.eq.s32.totalorder %s20, 0
      %p41 = por %p39, %p40
      %p42 = scmp.ne.s32.totalorder %s28, %s29
      %p43 = scmp.eq.s32.totalorder %s21, 1
      %p44 = por %p42, %p43
      %p46 = scmp.ne.s32.totalorder %s29, %s45
      %p47 = scmp.eq.s32.totalorder %s21, 0
      %p48 = por %p46, %p47
      %s50 = sadd.s32 %s49, 1
      %p53 = scmp.eq.s32.totalorder %s15, 1
      %p54 = scmp.ne.s32.totalorder %s49, %s51
      %p55 = scmp.eq.s32.totalorder %s15, 0
      %p56 = por %p54, %p55
      %p57 = scmp.ne.s32.totalorder %s49, %s51
      %p58 = scmp.eq.s32.totalorder %s20, 1
      %p59 = por %p57, %p58
      %p60 = scmp.ne.s32.totalorder %s51, %s52
      %p61 = scmp.eq.s32.totalorder %s20, 0
      %p62 = por %p60, %p61
      %p63 = scmp.ne.s32.totalorder %s51, %s52
      %p64 = scmp.eq.s32.totalorder %s21, 1
      %p65 = por %p63, %p64
      %p67 = scmp.ne.s32.totalorder %s52, %s66
      %p68 = scmp.eq.s32.totalorder %s21, 0
      %p69 = por %p67, %p68
      %s70 = ssub.s32 %s15, %s22
      %p71 = scmp.eq.s32.totalorder %s70, 0
      %s73 = sadd.s32 %s72, 1
      %s74 = scalar_select %p71, %s72, %s73
      %p77 = pneg %p71
      %p78 = scmp.eq.s32.totalorder %s15, 1
      %p79 = por %p77, %p78
      %p80 = scmp.ne.s32.totalorder %s72, %s75
      %p81 = scmp.eq.s32.totalorder %s15, 0
      %p82 = por %p80, %p81
      %p83 = scmp.ne.s32.totalorder %s72, %s75
      %p84 = scmp.eq.s32.totalorder %s20, 1
      %p85 = por %p83, %p84
      %p86 = scmp.ne.s32.totalorder %s75, %s76
      %p87 = scmp.eq.s32.totalorder %s20, 0
      %p88 = por %p86, %p87
      %p89 = scmp.ne.s32.totalorder %s75, %s76
      %p90 = scmp.eq.s32.totalorder %s21, 1
      %p91 = por %p89, %p90
      %p93 = scmp.ne.s32.totalorder %s76, %s92
      %p94 = scmp.eq.s32.totalorder %s21, 0
      %p95 = por %p93, %p94
      %p96 = scmp.le.s32.totalorder 1, %s15
      %p97 = scmp.lt.s32.totalorder %s15, 3
      %p98 = pnand %p96, %p97
      %p99 = pneg %p98
      // Predicated region
      $region9: #{tpu_custom_call.1} parent=5 // pred_check
        _
      $region10: #{tpu_custom_call.1} parent=5 // pred_check_branch
        %101 = sbr.rel (%p98) target = $region12
      $region11: #{tpu_custom_call.1} parent=5 // pred_region
        %s102 = ssub.s32 %s15, 1
        // Predicated region
        $region13: #{tpu_custom_call.1} parent=11 // pred_check
          %p103 = pneg %p62
        $region14: #{tpu_custom_call.1} parent=11 // pred_check_branch
          %105 = sbr.rel (%p103) target = $region16
        $region15: #{tpu_custom_call.1} parent=11 // pred_region
          %s107 = ssub.s32 512, 512
          %108 = vsyncadd [#allocation6], %s107
          %s109 = sshll.u32 [#allocation5], 4
          %s110 = int_to_ptr.vmem [resolvable:$true] %s109
          %115 = dma.hbm_to_vmem [thread:$0]  %s1, 512, %s110, [#allocation6], 128, 128, 8
        $region16: #{tpu_custom_call.1} parent=11 // pred_fallthru
          _
      $region12: #{tpu_custom_call.1} parent=5 // pred_fallthru
        _
      %p116 = scmp.lt.s32.totalorder %s15, 2
      // Predicated region
      $region17: #{tpu_custom_call.1} parent=5 // pred_check
        %p117 = pneg %p116
      $region18: #{tpu_custom_call.1} parent=5 // pred_check_branch
        %119 = sbr.rel (%p117) target = $region20
      $region19: #{tpu_custom_call.1} parent=5 // pred_region
        // Predicated region
        $region21: #{tpu_custom_call.1} parent=19 // pred_check
          %p120 = pneg %p35
        $region22: #{tpu_custom_call.1} parent=19 // pred_check_branch
          %122 = sbr.rel (%p120) target = $region24
        $region23: #{tpu_custom_call.1} parent=19 // pred_region
          %s123 = sand.u32 %s25, 1
          %s124 = scalar_lea.sflag [#allocation3], %s123
          %s125 = sand.u32 %s25, 1
          %s126 = smul.addr %s125, 8
          %s127 = scalar_lea.vmem [#allocation2], %s126
          %s129 = ssub.s32 128, 128
          %130 = vsyncadd %s124, %s129
          %s131 = smul.addr %s15, 128
          %s132 = scalar_lea.hbm %s0, %s131
          %s134 = sshll.u32 %s127, 4
          %s135 = int_to_ptr.vmem [resolvable:$true] %s134
          %137 = dma.hbm_to_vmem [thread:$0]  %s132, 128, %s135, %s124
        $region24: #{tpu_custom_call.1} parent=19 // pred_fallthru
          _
      $region20: #{tpu_custom_call.1} parent=5 // pred_fallthru
        _
      %p138 = scmp.le.s32.totalorder 1, %s15
      %p139 = scmp.lt.s32.totalorder %s15, 3
      %p140 = pnand %p138, %p139
      %p141 = pneg %p140
      // Predicated region
      $region25: #{tpu_custom_call.1} parent=5 // pred_check
        _
      $region26: #{tpu_custom_call.1} parent=5 // pred_check_branch
        %143 = sbr.rel (%p140) target = $region28
      $region27: #{tpu_custom_call.1} parent=5 // pred_region
        %s144 = ssub.s32 %s15, 1
        %s145 = sand.u32 %s28, 1
        %s146 = scalar_lea.sflag [#allocation3], %s145
        %s147 = sand.u32 %s28, 1
        %s148 = smul.addr %s147, 8
        %s149 = scalar_lea.vmem [#allocation2], %s148
        // Predicated region
        $region29: #{tpu_custom_call.1} parent=27 // pred_check
          %p150 = pneg %p41
        $region30: #{tpu_custom_call.1} parent=27 // pred_check_branch
          %152 = sbr.rel (%p150) target = $region32
        $region31: #{tpu_custom_call.1} parent=27 // pred_region
          %153 = dma.done %s146, 128
        $region32: #{tpu_custom_call.1} parent=27 // pred_fallthru
          _
        // Predicated region
        $region33: #{tpu_custom_call.1} parent=27 // pred_check
          %p154 = pneg %p62
        $region34: #{tpu_custom_call.1} parent=27 // pred_check_branch
          %156 = sbr.rel (%p154) target = $region36
        $region35: #{tpu_custom_call.1} parent=27 // pred_region
          %157 = dma.done [#allocation6], 512
        $region36: #{tpu_custom_call.1} parent=27 // pred_fallthru
          _
        %s158 = sand.u32 %s28, 1
        %s159 = scalar_lea.sflag [#allocation3], %s158
        %s160 = sand.u32 %s28, 1
        %s161 = smul.addr %s160, 8
        %s162 = scalar_lea.vmem [#allocation2], %s161
        %p163 = pneg %p41
        %p164 = pneg %p38
        %p165 = pneg %p62
        %p166 = pneg %p59
        %p167 = pneg %p88
        %p168 = pneg %p85
        %s169 = sand.u32 %s75, 1
        %s170 = scalar_lea.sflag [#allocation4], %s169
        %s171 = sand.u32 %s75, 1
        %s172 = smul.addr %s171, 16
        %s173 = scalar_lea.vmem [#allocation7], %s172
        %v174 = vld [vmem:[%s149] sm:$0xff]
        %v175 = vld [vmem:[#allocation5] sm:$0xff]
        %v176 = vld [vmem:[#allocation5 + $0x8] sm:$0xff]
        %v177 = vld [vmem:[#allocation5 + $0x10] sm:$0xff]
        %v178 = vld [vmem:[#allocation5 + $0x18] sm:$0xff]
        %vm179 = vcmask 261120
        %v181 = vsel %vm179, %v174, 0
        %183 = vmatprep.subr.mxu0 0.0
        %184 = vmatpush1.msra.mxu0 0.0
        %185 = vmatprep.subr.mxu0 0.0
        %186 = vmatpush1.msra.mxu0 0.0
        %187 = vmatprep.subr.mxu0 0.0
        %188 = vmatpush1.msra.mxu0 0.0
        %189 = vmatprep.subr.mxu0 0.0
        %190 = vmatpush1.msra.mxu0 0.0
        %191 = vmatprep.subr.mxu0 0.0
        %192 = vmatpush1.msra.mxu0 0.0
        %193 = vmatprep.subr.mxu0 0.0
        %194 = vmatpush1.msra.mxu0 0.0
        %195 = vmatprep.subr.mxu0 0.0
        %196 = vmatpush1.msra.mxu0 0.0
        %197 = vmatprep.subr.mxu0 0.0
        %198 = vmatpush1.msra.mxu0 0.0
        %199 = vmatprep.subr.mxu0 0.0
        %200 = vmatpush1.msra.mxu0 0.0
        %201 = vmatprep.subr.mxu0 0.0
        %202 = vmatpush1.msra.mxu0 0.0
        %203 = vmatprep.subr.mxu0 0.0
        %204 = vmatpush1.msra.mxu0 0.0
        %205 = vmatprep.subr.mxu0 0.0
        %206 = vmatpush1.msra.mxu0 0.0
        %207 = vmatprep.subr.mxu0 0.0
        %208 = vmatpush1.msra.mxu0 %v178
        %209 = vmatprep.subr.mxu0 0.0
        %210 = vmatpush1.msra.mxu0 %v177
        %211 = vmatprep.subr.mxu0 0.0
        %212 = vmatpush1.msra.mxu0 %v176
        %213 = vmatprep.subr.mxu0 0.0
        %214 = vmatpush1.msra.mxu0 %v175
        %215 = vmatprep.subr.mxu0 0.0
        %216 = vmatpush2.msra.mxu0 0.0
        %217 = vmatprep.subr.mxu0 0.0
        %218 = vmatpush2.msra.mxu0 0.0
        %219 = vmatprep.subr.mxu0 0.0
        %220 = vmatpush2.msra.mxu0 0.0
        %221 = vmatprep.subr.mxu0 0.0
        %222 = vmatpush2.msra.mxu0 0.0
        %223 = vmatprep.subr.mxu0 0.0
        %224 = vmatpush2.msra.mxu0 0.0
        %225 = vmatprep.subr.mxu0 0.0
        %226 = vmatpush2.msra.mxu0 0.0
        %227 = vmatprep.subr.mxu0 0.0
        %228 = vmatpush2.msra.mxu0 0.0
        %229 = vmatprep.subr.mxu0 0.0
        %230 = vmatpush2.msra.mxu0 0.0
        %231 = vmatprep.subr.mxu0 0.0
        %232 = vmatpush2.msra.mxu0 0.0
        %233 = vmatprep.subr.mxu0 0.0
        %234 = vmatpush2.msra.mxu0 0.0
        %235 = vmatprep.subr.mxu0 0.0
        %236 = vmatpush2.msra.mxu0 0.0
        %237 = vmatprep.subr.mxu0 0.0
        %238 = vmatpush2.msra.mxu0 0.0
        %239 = vmatprep.subr.mxu0 0.0
        %240 = vmatpush2.msra.mxu0 0.0
        %241 = vmatprep.subr.mxu0 0.0
        %242 = vmatpush2.msra.mxu0 0.0
        %243 = vmatprep.subr.mxu0 0.0
        %244 = vmatpush2.msra.mxu0 0.0
        %245 = vmatprep.subr.mxu0 0.0
        %246 = vmatpush2.msra.mxu0 0.0
        %247 = vmatprep.mubr.f32.mxu0 0.0
        %248 = vmatmul.mubr.f32.gmra.mxu0 %v181
        %v249 = vpop.f32.mrf.mxu0
        %v250 = vadd.f32 0.0, %v249
        %v251 = vpop.f32.mrf.mxu0
        %252 = vdwg.mxu0
        %254 = vrot.lane.b32.xlu0 %v250, 32
        %v255 = vpop.permute.xlu0 %254
        %257 = vrot.lane.b32.xlu0 %v250, 64
        %v258 = vpop.permute.xlu0 %257
        %260 = vrot.lane.b32.xlu0 %v250, 96
        %v261 = vpop.permute.xlu0 %260
        %v263 = vsel %vm179, %v250, %v255
        %vm264 = vcmask 523264
        %v265 = vsel %vm264, %v263, %v258
        %vm266 = vcmask 785408
        %v267 = vsel %vm266, %v265, %v261
        %268 = vst [vmem:[%s173] sm:$0xff] %v267
        %269 = vst [vmem:[%s173 + $0x8] sm:$0xff] %v267
        %s270 = sand.u32 %s75, 1
        %s271 = scalar_lea.sflag [#allocation4], %s270
        %s272 = sand.u32 %s75, 1
        %s273 = smul.addr %s272, 16
        %s274 = scalar_lea.vmem [#allocation7], %s273
        // Predicated region
        $region37: #{tpu_custom_call.1} parent=27 // pred_check
          %p275 = pneg %p85
        $region38: #{tpu_custom_call.1} parent=27 // pred_check_branch
          %277 = sbr.rel (%p275) target = $region40
        $region39: #{tpu_custom_call.1} parent=27 // pred_region
          %s279 = ssub.s32 256, 256
          %280 = vsyncadd %s271, %s279
          %s281 = smul.addr %s20, 2
          %s282 = smul.addr %s281, 128
          %s283 = scalar_lea.hbm %s2, %s282
          %s285 = sshll.u32 %s274, 4
          %s286 = int_to_ptr.vmem [resolvable:$true] %s285
          %288 = dma.vmem_to_hbm [thread:$0]  %s286, 256, %s283, %s271
        $region40: #{tpu_custom_call.1} parent=27 // pred_fallthru
          _
      $region28: #{tpu_custom_call.1} parent=5 // pred_fallthru
        _
      %p289 = scmp.le.s32.totalorder 2, %s15
      // Predicated region
      $region41: #{tpu_custom_call.1} parent=5 // pred_check
        %p290 = pneg %p289
      $region42: #{tpu_custom_call.1} parent=5 // pred_check_branch
        %292 = sbr.rel (%p290) target = $region44
      $region43: #{tpu_custom_call.1} parent=5 // pred_region
        %s293 = ssub.s32 %s15, 2
        // Predicated region
        $region45: #{tpu_custom_call.1} parent=43 // pred_check
          %p294 = pneg %p91
        $region46: #{tpu_custom_call.1} parent=43 // pred_check_branch
          %296 = sbr.rel (%p294) target = $region48
        $region47: #{tpu_custom_call.1} parent=43 // pred_region
          %s297 = sand.u32 %s76, 1
          %s298 = scalar_lea.sflag [#allocation4], %s297
          %s299 = sand.u32 %s76, 1
          %s300 = smul.addr %s299, 16
          %s301 = scalar_lea.vmem [#allocation7], %s300
          %302 = dma.done %s298, 256
        $region48: #{tpu_custom_call.1} parent=43 // pred_fallthru
          _
      $region44: #{tpu_custom_call.1} parent=5 // pred_fallthru
        _
    $region6: #{tpu_custom_call.1} parent=1 // loop_footer
      %s19 = sadd.s32 1, %s15
    $region7: #{tpu_custom_call.1} parent=1 // loop_footer_branch
      %14 = sbr.rel target = $region3
    $region8: #{tpu_custom_call.1} parent=1 // loop_exit
      _
    %303 = vsyncpa [#allocation3], 1
    %s304 = scalar_lea.sflag [#allocation3], 1
    %305 = vsyncpa %s304, 1
    %306 = vsyncpa [#allocation6], 1
    %307 = vsyncpa [#allocation4], 1
    %s308 = scalar_lea.sflag [#allocation4], 1
    %309 = vsyncpa %s308, 1

</llo_original>
